<compile_context>
chip_gen: v7x
topology: tpu7x:2x2x1
jax: 0.10.0
libtpu: 0.0.40
codegen_flags: <defaults>
</compile_context>

<pallas_src>
import functools

import jax
import jax.numpy as jnp
from jax.experimental import pallas as pl
from jax.experimental.pallas import tpu as pltpu


_SQRT_2_OVER_PI = 0.7978845608028654


def _gelu(x):
    """OpenAI tanh-approx gelu, exactly as gelu_impl in the PyTorch module."""
    return 0.5 * x * (1.0 + jnp.tanh(_SQRT_2_OVER_PI * x * (1.0 + 0.044715 * x * x)))


def _round_up(v, m):
    return -(-v // m) * m


def _divisor_tiles(F):
    """Multiples of 128 that divide F, descending."""
    return sorted((t for t in range(128, F + 1, 128) if F % t == 0), reverse=True)


def _hw_params():
    """Physical VMEM bytes per core and a lowercase device-kind string."""
    kind = ""
    try:
        kind = jax.devices()[0].device_kind.lower()
    except Exception:
        pass
    vmem = None
    try:
        info = pltpu.get_tpu_info()
        for attr in ("vmem_capacity_bytes", "vmem_bytes", "vmem_size_bytes"):
            v = getattr(info, attr, None)
            if v:
                vmem = int(v)
                break
    except Exception:
        vmem = None
    if vmem is None:
        vmem = (64 << 20) if "v7" in kind else (128 << 20)
    return vmem, kind


# --------------------------------------------------------------------------
# Kernels
# --------------------------------------------------------------------------
def _make_fused_kernel(F, chunk):
    """Fused path: both weight matrices resident in VMEM.

    chunk < F chunks the gelu + second matmul over the 4H axis (bounds the
    (tm, 4H) f32 intermediate on small-VMEM chips) while keeping weights
    resident; chunk == F is the single-pass variant.
    """
    n_chunks = max(1, F // chunk)

    def kernel(x_ref, w1_ref, b1_ref, w2_ref, b2_ref, o_ref):
        x = x_ref[...]
        b2 = b2_ref[...].astype(jnp.float32)
        if n_chunks == 1:
            h = jnp.dot(x, w1_ref[...], preferred_element_type=jnp.float32)
            h = h + b1_ref[...].astype(jnp.float32)
            g = _gelu(h)
            out = jnp.dot(g.astype(w2_ref.dtype), w2_ref[...],
                          preferred_element_type=jnp.float32)
            o_ref[...] = (out + b2).astype(o_ref.dtype)
        else:
            def body(c, acc):
                start = pl.multiple_of(c * chunk, 128)
                h = jnp.dot(x, w1_ref[:, pl.ds(start, chunk)],
                            preferred_element_type=jnp.float32)
                h = h + b1_ref[:, pl.ds(start, chunk)].astype(jnp.float32)
                g = _gelu(h)
                return acc + jnp.dot(g.astype(w2_ref.dtype),
                                     w2_ref[pl.ds(start, chunk), :],
                                     preferred_element_type=jnp.float32)

            acc = jax.lax.fori_loop(0, n_chunks, body,
                                    jnp.zeros(o_ref.shape, jnp.float32))
            o_ref[...] = (acc + b2).astype(o_ref.dtype)

    return kernel


def _mlp_kernel_accum_f32out(x_ref, w1_ref, b1_ref, w2_ref, b2_ref, o_ref):
    """4H axis tiled on grid axis 1; accumulate directly into the f32 output."""
    k = pl.program_id(1)
    h = jnp.dot(x_ref[...], w1_ref[...], preferred_element_type=jnp.float32)
    h = h + b1_ref[...].astype(jnp.float32)
    g = _gelu(h)
    part = jnp.dot(g.astype(w2_ref.dtype), w2_ref[...],
                   preferred_element_type=jnp.float32)

    @pl.when(k == 0)
    def _():
        o_ref[...] = part + b2_ref[...].astype(jnp.float32)

    @pl.when(k != 0)
    def _():
        o_ref[...] = o_ref[...] + part


def _mlp_kernel_accum_scratch(x_ref, w1_ref, b1_ref, w2_ref, b2_ref, o_ref,
                              acc_ref):
    """4H axis tiled on grid axis 1; f32 scratch accumulator (non-f32 output)."""
    k = pl.program_id(1)

    @pl.when(k == 0)
    def _():
        acc_ref[...] = jnp.zeros_like(acc_ref)

    h = jnp.dot(x_ref[...], w1_ref[...], preferred_element_type=jnp.float32)
    h = h + b1_ref[...].astype(jnp.float32)
    g = _gelu(h)
    acc_ref[...] += jnp.dot(g.astype(w2_ref.dtype), w2_ref[...],
                            preferred_element_type=jnp.float32)

    @pl.when(k == pl.num_programs(1) - 1)
    def _():
        o_ref[...] = (acc_ref[...]
                      + b2_ref[...].astype(jnp.float32)).astype(o_ref.dtype)


# --------------------------------------------------------------------------
# Wrapper
# --------------------------------------------------------------------------
@functools.partial(
    jax.jit, static_argnames=("tm", "tn4", "fused_chunk", "use_bf16_matmul"))
def gpt2_mlp(hidden_states, w1, b1, w2, b2, *, tm=None, tn4=None,
             fused_chunk=None, use_bf16_matmul=False):
    """GPT2MLP forward.

    hidden_states: [B, S, H]; w1: [H, 4H] (= dense_h_to_4h.weight.T); b1: [4H];
    w2: [4H, H] (= dense_4h_to_h.weight.T); b2: [H].
    use_bf16_matmul=True casts f32 operands to bf16 for the native MXU rate
    (f32 accumulation, output stays in the input dtype).
    """
    B, S, H = hidden_states.shape
    F = 4 * H
    assert w1.shape == (H, F) and w2.shape == (F, H)
    assert b1.shape == (F,) and b2.shape == (H,)

    out_dtype = hidden_states.dtype
    M = B * S
    x = hidden_states.reshape(M, H)

    if use_bf16_matmul:
        x = x.astype(jnp.bfloat16)
        w1 = w1.astype(jnp.bfloat16)
        w2 = w2.astype(jnp.bfloat16)

    xbytes = jnp.dtype(x.dtype).itemsize
    wbytes = jnp.dtype(w1.dtype).itemsize
    obytes = jnp.dtype(out_dtype).itemsize

    vmem_cap, kind = _hw_params()
    vmem_limit_cap = int(vmem_cap * 0.84)     # ~54 MiB v7x, ~107 MiB v5e/v6e
    weight_budget = int(vmem_cap * 0.45)      # resident-weight budget
    select_budget = int(vmem_limit_cap * 0.9)  # headroom for the compiler

    # ---- row tile ---------------------------------------------------------
    if tm is None:
        tm = 256 if ("v5e" in kind or "v5 lite" in kind or "v5lite" in kind) else 512
    tm_eff = max(8, min(tm, _round_up(M, 8)))
    if M >= 16:
        # Keep >= 2 row tiles so both v7x TensorCores / megacore see work.
        tm_eff = min(tm_eff, _round_up(-(-M // 2), 8))

    use_scratch_acc = (out_dtype != jnp.float32)
    weights_total = 2 * H * F * wbytes

    def fused_footprint(tm_, chunk_):
        wb = weights_total + (F + H) * wbytes          # single-buffered weights/biases
        io = 2 * tm_ * H * (xbytes + obytes)           # double-buffered x / out tiles
        if chunk_ >= F:
            interm = 4 * tm_ * F * 4 + tm_ * H * 4
        else:
            interm = 4 * tm_ * chunk_ * 4 + 2 * tm_ * H * 4
        return wb + io + interm

    def accum_footprint(tm_, tn4_):
        wb = 4 * H * tn4_ * wbytes                     # w1/w2 slabs, double-buffered
        bb = 2 * tn4_ * wbytes + H * wbytes            # b1 double, b2 single
        io = 2 * tm_ * H * (xbytes + obytes)
        acc = tm_ * H * 4 if use_scratch_acc else 0
        interm = 5 * tm_ * tn4_ * 4 + tm_ * H * 4
        return wb + bb + io + acc + interm

    # ---- path selection ----------------------------------------------------
    use_accum = tn4 is not None
    chunk = F if fused_chunk is None else fused_chunk
    if not use_accum:
        if F % 128 != 0:
            chunk = F                                   # only whole-F fused possible
        elif weights_total <= weight_budget:
            if fused_chunk is not None:
                assert F % fused_chunk == 0 and \
                    (fused_chunk % 128 == 0 or fused_chunk == F)
            else:
                chunk = None
                for c in _divisor_tiles(F):
                    if fused_footprint(tm_eff, c) <= select_budget:
                        chunk = c
                        break
                if chunk is None:
                    use_accum = True
        else:
            use_accum = True

    if use_accum:
        assert F % 128 == 0, "4*hidden must be a multiple of 128 for the tiled path"
        if tn4 is None:
            tn4_sel, tm_try = None, tm_eff
            while tn4_sel is None:
                for c in _divisor_tiles(F):
                    if accum_footprint(tm_try, c) <= select_budget:
                        tn4_sel = c
                        break
                if tn4_sel is None:
                    if tm_try <= 8:
                        tn4_sel = 128                   # best effort
                    else:
                        tm_try = max(8, _round_up(tm_try // 2, 8))
            tn4 = tn4_sel
            tm_eff = tm_try
        assert F % tn4 == 0 and tn4 % 128 == 0, \
            "tn4 must divide 4H and be a multiple of 128"

    # ---- pad rows to the tile ----------------------------------------------
    M_pad = _round_up(M, tm_eff)
    if M_pad != M:
        x = jnp.concatenate([x, jnp.zeros((M_pad - M, H), x.dtype)], axis=0)
    n_rows = M_pad // tm_eff

    b1_2d = b1.reshape(1, F)
    b2_2d = b2.reshape(1, H)

    # ---- specs / kernel ----------------------------------------------------
    if not use_accum:
        kernel = _make_fused_kernel(F, chunk)
        grid = (n_rows,)
        in_specs = [
            pl.BlockSpec((tm_eff, H), lambda i: (i, 0)),
            pl.BlockSpec((H, F), lambda i: (0, 0), pipeline_mode=pl.Buffered(1)),
            pl.BlockSpec((1, F), lambda i: (0, 0), pipeline_mode=pl.Buffered(1)),
            pl.BlockSpec((F, H), lambda i: (0, 0), pipeline_mode=pl.Buffered(1)),
            pl.BlockSpec((1, H), lambda i: (0, 0), pipeline_mode=pl.Buffered(1)),
        ]
        out_specs = pl.BlockSpec((tm_eff, H), lambda i: (i, 0))
        scratch_shapes = []
        dim_sem = ("parallel",)
        footprint = fused_footprint(tm_eff, chunk)
        weight_traffic = weights_total + (F + H) * wbytes
    else:
        if use_scratch_acc:
            kernel = _mlp_kernel_accum_scratch
            scratch_shapes = [pltpu.VMEM((tm_eff, H), jnp.float32)]
        else:
            kernel = _mlp_kernel_accum_f32out
            scratch_shapes = []
        n_k = F // tn4
        grid = (n_rows, n_k)
        in_specs = [
            pl.BlockSpec((tm_eff, H), lambda i, k: (i, 0)),
            pl.BlockSpec((H, tn4), lambda i, k: (0, k)),
            pl.BlockSpec((1, tn4), lambda i, k: (0, k)),
            pl.BlockSpec((tn4, H), lambda i, k: (k, 0)),
            pl.BlockSpec((1, H), lambda i, k: (0, 0), pipeline_mode=pl.Buffered(1)),
        ]
        out_specs = pl.BlockSpec((tm_eff, H), lambda i, k: (i, 0))
        dim_sem = ("parallel", "arbitrary")
        footprint = accum_footprint(tm_eff, tn4)
        # Weights are re-streamed once per row tile on this path.
        weight_traffic = n_rows * (weights_total + (F + H) * wbytes)

    vmem_limit = int(footprint * 1.2) + (2 << 20)
    vmem_limit = max(16 << 20, min(vmem_limit, vmem_limit_cap))

    cost = pl.CostEstimate(
        flops=4 * M_pad * H * F,
        transcendentals=M_pad * F,
        bytes_accessed=int(M_pad * H * (xbytes + obytes) + weight_traffic),
    )

    out = pl.pallas_call(
        kernel,
        out_shape=jax.ShapeDtypeStruct((M_pad, H), out_dtype),
        grid_spec=pltpu.PrefetchScalarGridSpec(
            num_scalar_prefetch=0,
            grid=grid,
            in_specs=in_specs,
            out_specs=out_specs,
            scratch_shapes=scratch_shapes,
        ),
        compiler_params=pltpu.CompilerParams(
            dimension_semantics=dim_sem,
            vmem_limit_bytes=vmem_limit,
        ),
        cost_estimate=cost,
    )(x, w1, b1_2d, w2, b2_2d)

    if M_pad != M:
        out = out[:M]
    return out.reshape(B, S, H)


def gpt2_mlp_reference(hidden_states, w1, b1, w2, b2):
    h = jnp.dot(hidden_states, w1) + b1
    g = _gelu(h)
    return jnp.dot(g, w2) + b2


if __name__ == "__main__":
    B, S, H = 2, 8, 128
    key = jax.random.PRNGKey(0)
    kx, kw1, kb1, kw2, kb2 = jax.random.split(key, 5)

    hidden_states = jax.random.normal(kx, (B, S, H), dtype=jnp.float32)
    w1 = 0.02 * jax.random.normal(kw1, (H, 4 * H), dtype=jnp.float32)
    b1 = 0.1 * jax.random.normal(kb1, (4 * H,), dtype=jnp.float32)
    w2 = 0.02 * jax.random.normal(kw2, (4 * H, H), dtype=jnp.float32)
    b2 = 0.1 * jax.random.normal(kb2, (H,), dtype=jnp.float32)

    ref = gpt2_mlp_reference(hidden_states, w1, b1, w2, b2)

    # 1) f32, fused resident-weight path.
    out = jax.block_until_ready(gpt2_mlp(hidden_states, w1, b1, w2, b2))
    assert out.shape == (B, S, H)
    assert jnp.allclose(out, ref, atol=5e-3, rtol=5e-3), "f32 fused path mismatch"

    # 2) f32, forced 4H tiling -> accumulate-directly-into-f32-output path.
    out_t = jax.block_until_ready(gpt2_mlp(hidden_states, w1, b1, w2, b2, tn4=128))
    assert jnp.allclose(out_t, ref, atol=5e-3, rtol=5e-3), "accum (f32 out) mismatch"

    # 3) f32, fused path with forced in-kernel 4H chunking (v7x VMEM bounding).
    out_c = jax.block_until_ready(
        gpt2_mlp(hidden_states, w1, b1, w2, b2, fused_chunk=128))
    assert jnp.allclose(out_c, ref, atol=5e-3, rtol=5e-3), "chunked fused mismatch"

    # 4) f32 inputs with opt-in bf16 MXU operands (f32 accumulation / f32 out).
    out_bfm = jax.block_until_ready(
        gpt2_mlp(hidden_states, w1, b1, w2, b2, use_bf16_matmul=True))
    assert out_bfm.dtype == jnp.float32
    assert jnp.allclose(out_bfm, ref, atol=3e-2, rtol=3e-2), "bf16-matmul mismatch"

    # 5) bf16 end-to-end with a row count (3*5=15) that needs padding.
    k3 = jax.random.PRNGKey(1)
    hs3 = jax.random.normal(k3, (3, 5, H), dtype=jnp.float32)
    ref3 = gpt2_mlp_reference(hs3, w1, b1, w2, b2)
    hs3_bf = hs3.astype(jnp.bfloat16)
    w1_bf, b1_bf = w1.astype(jnp.bfloat16), b1.astype(jnp.bfloat16)
    w2_bf, b2_bf = w2.astype(jnp.bfloat16), b2.astype(jnp.bfloat16)
    out3 = jax.block_until_ready(gpt2_mlp(hs3_bf, w1_bf, b1_bf, w2_bf, b2_bf))
    assert out3.shape == (3, 5, H) and out3.dtype == jnp.bfloat16
    assert jnp.allclose(out3.astype(jnp.float32), ref3, atol=3e-2, rtol=3e-2), \
        "bf16 fused mismatch"

    # 6) bf16 end-to-end on the tiled path (exercises the f32 scratch accumulator).
    out3_t = jax.block_until_ready(
        gpt2_mlp(hs3_bf, w1_bf, b1_bf, w2_bf, b2_bf, tn4=128))
    assert jnp.allclose(out3_t.astype(jnp.float32), ref3, atol=3e-2, rtol=3e-2), \
        "bf16 accum mismatch"

    print("KERNEL_OK")
</pallas_src>

<mosaic_0001>
module attributes {stable_mosaic.version = 11 : i64} {
  func.func @kernel(%arg0: i32, %arg1: memref<8x128xf32, #tpu.memory_space<vmem>>, %arg2: memref<128x512xf32, #tpu.memory_space<vmem>>, %arg3: memref<1x512xf32, #tpu.memory_space<vmem>>, %arg4: memref<512x128xf32, #tpu.memory_space<vmem>>, %arg5: memref<1x128xf32, #tpu.memory_space<vmem>>, %arg6: memref<8x128xf32, #tpu.memory_space<vmem>>) attributes {dimension_semantics = [#tpu.dimension_semantics<parallel>], iteration_bounds = array<i64: 2>, scalar_prefetch = 0 : i64, scratch_operands = 0 : i64, tpu.core_type = #tpu.core_type<tc>, window_params = [{transform_indices = @transform_0, window_bounds = array<i64: 8, 128>}, {pipeline_mode = #tpu.pipeline_mode<synchronous>, transform_indices = @transform_1, window_bounds = array<i64: 128, 512>}, {pipeline_mode = #tpu.pipeline_mode<synchronous>, transform_indices = @transform_2, window_bounds = array<i64: 1, 512>}, {pipeline_mode = #tpu.pipeline_mode<synchronous>, transform_indices = @transform_3, window_bounds = array<i64: 512, 128>}, {pipeline_mode = #tpu.pipeline_mode<synchronous>, transform_indices = @transform_4, window_bounds = array<i64: 1, 128>}, {transform_indices = @transform_5, window_bounds = array<i64: 8, 128>}]} {
    %c0 = arith.constant 0 : index
    %c0_0 = arith.constant 0 : index
    %0 = vector.load %arg1[%c0, %c0_0] : memref<8x128xf32, #tpu.memory_space<vmem>>, vector<8x128xf32>
    %c0_1 = arith.constant 0 : index
    %c0_2 = arith.constant 0 : index
    %1 = vector.load %arg5[%c0_1, %c0_2] : memref<1x128xf32, #tpu.memory_space<vmem>>, vector<1x128xf32>
    %c0_3 = arith.constant 0 : index
    %c0_4 = arith.constant 0 : index
    %2 = vector.load %arg2[%c0_3, %c0_4] : memref<128x512xf32, #tpu.memory_space<vmem>>, vector<128x512xf32>
    %cst = arith.constant dense<0.000000e+00> : vector<8x512xf32>
    %3 = tpu.matmul %0, %2, %cst {dimension_numbers = #tpu.dot_dimension_numbers<[1], [0], [0], [1], [0, 0, 1, 1], [], []>} : vector<8x128xf32>, vector<128x512xf32>, vector<8x512xf32> -> vector<8x512xf32>
    %c0_5 = arith.constant 0 : index
    %c0_6 = arith.constant 0 : index
    %4 = vector.load %arg3[%c0_5, %c0_6] : memref<1x512xf32, #tpu.memory_space<vmem>>, vector<1x512xf32>
    %5 = vector.broadcast %4 : vector<1x512xf32> to vector<8x512xf32>
    %6 = arith.addf %3, %5 : vector<8x512xf32>
    %cst_7 = arith.constant 5.000000e-01 : f32
    %7 = vector.broadcast %cst_7 : f32 to vector<8x512xf32>
    %8 = arith.mulf %7, %6 : vector<8x512xf32>
    %cst_8 = arith.constant 0.797884583 : f32
    %9 = vector.broadcast %cst_8 : f32 to vector<8x512xf32>
    %10 = arith.mulf %9, %6 : vector<8x512xf32>
    %cst_9 = arith.constant 4.471500e-02 : f32
    %11 = vector.broadcast %cst_9 : f32 to vector<8x512xf32>
    %12 = arith.mulf %11, %6 : vector<8x512xf32>
    %13 = arith.mulf %12, %6 : vector<8x512xf32>
    %cst_10 = arith.constant 1.000000e+00 : f32
    %14 = vector.broadcast %cst_10 : f32 to vector<8x512xf32>
    %15 = arith.addf %14, %13 : vector<8x512xf32>
    %16 = arith.mulf %10, %15 : vector<8x512xf32>
    %17 = math.tanh %16 : vector<8x512xf32>
    %cst_11 = arith.constant 1.000000e+00 : f32
    %18 = vector.broadcast %cst_11 : f32 to vector<8x512xf32>
    %19 = arith.addf %18, %17 : vector<8x512xf32>
    %20 = arith.mulf %8, %19 : vector<8x512xf32>
    %c0_12 = arith.constant 0 : index
    %c0_13 = arith.constant 0 : index
    %21 = vector.load %arg4[%c0_12, %c0_13] : memref<512x128xf32, #tpu.memory_space<vmem>>, vector<512x128xf32>
    %cst_14 = arith.constant dense<0.000000e+00> : vector<8x128xf32>
    %22 = tpu.matmul %20, %21, %cst_14 {dimension_numbers = #tpu.dot_dimension_numbers<[1], [0], [0], [1], [0, 0, 1, 1], [], []>} : vector<8x512xf32>, vector<512x128xf32>, vector<8x128xf32> -> vector<8x128xf32>
    %23 = vector.broadcast %1 : vector<1x128xf32> to vector<8x128xf32>
    %24 = arith.addf %22, %23 : vector<8x128xf32>
    %c0_15 = arith.constant 0 : index
    %c0_16 = arith.constant 0 : index
    %25 = vector.load %arg6[%c0_15, %c0_16] : memref<8x128xf32, #tpu.memory_space<vmem>>, vector<8x128xf32>
    tpu.vector_store %arg6[%c0_15, %c0_16], %24 {strides = array<i32>} : memref<8x128xf32, #tpu.memory_space<vmem>>, vector<8x128xf32>,
    return
  }
  func.func @transform_0(%arg0: i32) -> (i32, i32) {
    %c0_i32 = arith.constant 0 : i32
    %c0_i32_0 = arith.constant 0 : i32
    return %arg0, %c0_i32 : i32, i32
  }
  func.func @transform_1(%arg0: i32) -> (i32, i32) {
    %c0_i32 = arith.constant 0 : i32
    %c0_i32_0 = arith.constant 0 : i32
    %c0_i32_1 = arith.constant 0 : i32
    return %c0_i32, %c0_i32_0 : i32, i32
  }
  func.func @transform_2(%arg0: i32) -> (i32, i32) {
    %c0_i32 = arith.constant 0 : i32
    %c0_i32_0 = arith.constant 0 : i32
    %c0_i32_1 = arith.constant 0 : i32
    return %c0_i32, %c0_i32_0 : i32, i32
  }
  func.func @transform_3(%arg0: i32) -> (i32, i32) {
    %c0_i32 = arith.constant 0 : i32
    %c0_i32_0 = arith.constant 0 : i32
    %c0_i32_1 = arith.constant 0 : i32
    return %c0_i32, %c0_i32_0 : i32, i32
  }
  func.func @transform_4(%arg0: i32) -> (i32, i32) {
    %c0_i32 = arith.constant 0 : i32
    %c0_i32_0 = arith.constant 0 : i32
    %c0_i32_1 = arith.constant 0 : i32
    return %c0_i32, %c0_i32_0 : i32, i32
  }
  func.func @transform_5(%arg0: i32) -> (i32, i32) {
    %c0_i32 = arith.constant 0 : i32
    %c0_i32_0 = arith.constant 0 : i32
    return %arg0, %c0_i32 : i32, i32
  }
}

</mosaic_0001>

<llo_original>
// kernel: gpt2_mlp.1
$region0: #{gpt2_mlp.1}
  #allocation0 [shape = 'u32[]', space=smem, size = 0x4, offset = 0x4, fixed_abs, tag = 'smem constant byte address 0x4 - core index']
  #allocation1 [shape = 'u32[144,128]{1,0:T(1,128)}', space=vmem, size = 0x12000, scoped, tag = 'internal scratch']
  %s0 = inlined_call_operand.hbm [shape: f32[16,128], index: 0, kind: input, shape index: {}]
  %s1 = inlined_call_operand.hbm [shape: f32[128,512], index: 1, kind: input, shape index: {}]
  %s2 = inlined_call_operand.vmem [shape: f32[1,512], index: 2, kind: input, shape index: {}]
  %s3 = inlined_call_operand.hbm [shape: f32[512,128], index: 3, kind: input, shape index: {}]
  %s4 = inlined_call_operand.vmem [shape: f32[1,128], index: 4, kind: input, shape index: {}]
  %s5 = inlined_call_operand.hbm [shape: f32[16,128], index: 5, kind: output, shape index: {}]
  %s6 = sld [smem:[#allocation0]]
  $region65: #{gpt2_mlp.1} parent=0
    _
  %s8 = ssub.s32 1, %s6
  %s9 = scalar_select 0, %s8, %s6
  $region1: #{gpt2_mlp.1} parent=0
    #allocation2 [shape = 'u8[8192]{0}', space=vmem, size = 0x2000, scoped, tag = 'input window, operand 0']
    #allocation3 [shape = 's32[2]{0}', space=sflag, size = 0x8, scoped, tag = 'scoped memory for gpt2_mlp.1']
    #allocation4 [shape = 's32[2]{0}', space=sflag, size = 0x8, scoped, tag = 'scoped memory for gpt2_mlp.1']
    #allocation5 [shape = 'u8[262144]{0}', space=vmem, size = 0x40000, scoped, tag = 'input window, operand 1, single buffered']
    #allocation6 [shape = 's32[1]{0}', space=sflag, size = 0x4, scoped, tag = 'scoped memory for gpt2_mlp.1']
    #allocation7 [shape = 'u8[262144]{0}', space=vmem, size = 0x40000, scoped, tag = 'input window, operand 3, single buffered']
    #allocation8 [shape = 'u8[8192]{0}', space=vmem, size = 0x2000, scoped, tag = 'output window, operand 0']
    %10 = vsyncpa [#allocation3], 0
    %s11 = scalar_lea.sflag [#allocation3], 1
    %12 = vsyncpa %s11, 0
    %13 = vsyncpa [#allocation6], 0
    %14 = vsyncpa [#allocation4], 0
    %s15 = scalar_lea.sflag [#allocation4], 1
    %16 = vsyncpa %s15, 0
    loop: start=0, step=1, limit=4
    $region2: #{gpt2_mlp.1} parent=1 // loop_pre_header
      _
    $region3: #{gpt2_mlp.1} parent=1 // loop_header
      %s18 = sphi 0, %s22
      %p19 = scmp.ge.s32.totalorder %s18, 4
      %s28 = sphi 0, %s30
      %s31 = sphi 0, %s28
      %s32 = sphi 0, %s31
      %s48 = sphi 0, %s32
      %s52 = sphi 0, %s52
      %s54 = sphi 0, %s52
      %s55 = sphi 0, %s54
      %s69 = sphi 0, %s55
      %s73 = sphi 0, %s73
      %s75 = sphi 0, %s73
      %s76 = sphi 0, %s75
      %s90 = sphi 0, %s76
      %s94 = sphi 0, %s94
      %s96 = sphi 0, %s94
      %s97 = sphi 0, %s96
      %s111 = sphi 0, %s97
      %s115 = sphi 0, %s115
      %s117 = sphi 0, %s115
      %s118 = sphi 0, %s117
      %s132 = sphi 0, %s118
      %s138 = sphi 0, %s140
      %s141 = sphi 0, %s138
      %s142 = sphi 0, %s141
      %s158 = sphi 0, %s142
    $region4: #{gpt2_mlp.1} parent=1 // loop_header_branch
      %21 = sbr.rel (%p19) target = $region8
    $region5: #{gpt2_mlp.1} parent=1 // loop_body
      %s23 = ssub.s32 %s18, 1
      %s24 = ssub.s32 %s18, 2
      %s25 = sadd.s32 %s18, 1
      %s26 = ssub.s32 %s18, %s25
      %p27 = scmp.eq.s32.totalorder %s26, 0
      %s29 = sadd.s32 %s28, 1
      %s30 = scalar_select %p27, %s28, %s29
      %p33 = pneg %p27
      %p34 = scmp.eq.s32.totalorder %s18, 1
      %p35 = por %p33, %p34
      %p36 = scmp.ne.s32.totalorder %s28, %s31
      %p37 = scmp.eq.s32.totalorder %s18, 0
      %p38 = por %p36, %p37
      %p39 = scmp.ne.s32.totalorder %s28, %s31
      %p40 = scmp.eq.s32.totalorder %s23, 1
      %p41 = por %p39, %p40
      %p42 = scmp.ne.s32.totalorder %s31, %s32
      %p43 = scmp.eq.s32.totalorder %s23, 0
      %p44 = por %p42, %p43
      %p45 = scmp.ne.s32.totalorder %s31, %s32
      %p46 = scmp.eq.s32.totalorder %s24, 1
      %p47 = por %p45, %p46
      %p49 = scmp.ne.s32.totalorder %s32, %s48
      %p50 = scmp.eq.s32.totalorder %s24, 0
      %p51 = por %p49, %p50
      %s53 = sadd.s32 %s52, 1
      %p56 = scmp.eq.s32.totalorder %s18, 1
      %p57 = scmp.ne.s32.totalorder %s52, %s54
      %p58 = scmp.eq.s32.totalorder %s18, 0
      %p59 = por %p57, %p58
      %p60 = scmp.ne.s32.totalorder %s52, %s54
      %p61 = scmp.eq.s32.totalorder %s23, 1
      %p62 = por %p60, %p61
      %p63 = scmp.ne.s32.totalorder %s54, %s55
      %p64 = scmp.eq.s32.totalorder %s23, 0
      %p65 = por %p63, %p64
      %p66 = scmp.ne.s32.totalorder %s54, %s55
      %p67 = scmp.eq.s32.totalorder %s24, 1
      %p68 = por %p66, %p67
      %p70 = scmp.ne.s32.totalorder %s55, %s69
      %p71 = scmp.eq.s32.totalorder %s24, 0
      %p72 = por %p70, %p71
      %s74 = sadd.s32 %s73, 1
      %p77 = scmp.eq.s32.totalorder %s18, 1
      %p78 = scmp.ne.s32.totalorder %s73, %s75
      %p79 = scmp.eq.s32.totalorder %s18, 0
      %p80 = por %p78, %p79
      %p81 = scmp.ne.s32.totalorder %s73, %s75
      %p82 = scmp.eq.s32.totalorder %s23, 1
      %p83 = por %p81, %p82
      %p84 = scmp.ne.s32.totalorder %s75, %s76
      %p85 = scmp.eq.s32.totalorder %s23, 0
      %p86 = por %p84, %p85
      %p87 = scmp.ne.s32.totalorder %s75, %s76
      %p88 = scmp.eq.s32.totalorder %s24, 1
      %p89 = por %p87, %p88
      %p91 = scmp.ne.s32.totalorder %s76, %s90
      %p92 = scmp.eq.s32.totalorder %s24, 0
      %p93 = por %p91, %p92
      %s95 = sadd.s32 %s94, 1
      %p98 = scmp.eq.s32.totalorder %s18, 1
      %p99 = scmp.ne.s32.totalorder %s94, %s96
      %p100 = scmp.eq.s32.totalorder %s18, 0
      %p101 = por %p99, %p100
      %p102 = scmp.ne.s32.totalorder %s94, %s96
      %p103 = scmp.eq.s32.totalorder %s23, 1
      %p104 = por %p102, %p103
      %p105 = scmp.ne.s32.totalorder %s96, %s97
      %p106 = scmp.eq.s32.totalorder %s23, 0
      %p107 = por %p105, %p106
      %p108 = scmp.ne.s32.totalorder %s96, %s97
      %p109 = scmp.eq.s32.totalorder %s24, 1
      %p110 = por %p108, %p109
      %p112 = scmp.ne.s32.totalorder %s97, %s111
      %p113 = scmp.eq.s32.totalorder %s24, 0
      %p114 = por %p112, %p113
      %s116 = sadd.s32 %s115, 1
      %p119 = scmp.eq.s32.totalorder %s18, 1
      %p120 = scmp.ne.s32.totalorder %s115, %s117
      %p121 = scmp.eq.s32.totalorder %s18, 0
      %p122 = por %p120, %p121
      %p123 = scmp.ne.s32.totalorder %s115, %s117
      %p124 = scmp.eq.s32.totalorder %s23, 1
      %p125 = por %p123, %p124
      %p126 = scmp.ne.s32.totalorder %s117, %s118
      %p127 = scmp.eq.s32.totalorder %s23, 0
      %p128 = por %p126, %p127
      %p129 = scmp.ne.s32.totalorder %s117, %s118
      %p130 = scmp.eq.s32.totalorder %s24, 1
      %p131 = por %p129, %p130
      %p133 = scmp.ne.s32.totalorder %s118, %s132
      %p134 = scmp.eq.s32.totalorder %s24, 0
      %p135 = por %p133, %p134
      %s136 = ssub.s32 %s18, %s25
      %p137 = scmp.eq.s32.totalorder %s136, 0
      %s139 = sadd.s32 %s138, 1
      %s140 = scalar_select %p137, %s138, %s139
      %p143 = pneg %p137
      %p144 = scmp.eq.s32.totalorder %s18, 1
      %p145 = por %p143, %p144
      %p146 = scmp.ne.s32.totalorder %s138, %s141
      %p147 = scmp.eq.s32.totalorder %s18, 0
      %p148 = por %p146, %p147
      %p149 = scmp.ne.s32.totalorder %s138, %s141
      %p150 = scmp.eq.s32.totalorder %s23, 1
      %p151 = por %p149, %p150
      %p152 = scmp.ne.s32.totalorder %s141, %s142
      %p153 = scmp.eq.s32.totalorder %s23, 0
      %p154 = por %p152, %p153
      %p155 = scmp.ne.s32.totalorder %s141, %s142
      %p156 = scmp.eq.s32.totalorder %s24, 1
      %p157 = por %p155, %p156
      %p159 = scmp.ne.s32.totalorder %s142, %s158
      %p160 = scmp.eq.s32.totalorder %s24, 0
      %p161 = por %p159, %p160
      %p162 = scmp.le.s32.totalorder 1, %s18
      %p163 = scmp.lt.s32.totalorder %s18, 3
      %p164 = pnand %p162, %p163
      %p165 = pneg %p164
      // Predicated region
      $region9: #{gpt2_mlp.1} parent=5 // pred_check
        _
      $region10: #{gpt2_mlp.1} parent=5 // pred_check_branch
        %167 = sbr.rel (%p164) target = $region12
      $region11: #{gpt2_mlp.1} parent=5 // pred_region
        %s168 = ssub.s32 %s18, 1
        // Predicated region
        $region13: #{gpt2_mlp.1} parent=11 // pred_check
          %p169 = pneg %p65
        $region14: #{gpt2_mlp.1} parent=11 // pred_check_branch
          %171 = sbr.rel (%p169) target = $region16
        $region15: #{gpt2_mlp.1} parent=11 // pred_region
          %s173 = ssub.s32 8192, 8192
          %174 = vsyncadd [#allocation6], %s173
          %s175 = sshll.u32 [#allocation5], 4
          %s176 = int_to_ptr.vmem [resolvable:$true] %s175
          %181 = dma.hbm_to_vmem [thread:$0]  %s1, 8192, %s176, [#allocation6], 512, 512, 32
        $region16: #{gpt2_mlp.1} parent=11 // pred_fallthru
          _
        // Predicated region
        $region17: #{gpt2_mlp.1} parent=11 // pred_check
          %p182 = pneg %p86
        $region18: #{gpt2_mlp.1} parent=11 // pred_check_branch
          %184 = sbr.rel (%p182) target = $region20
        $region19: #{gpt2_mlp.1} parent=11 // pred_region
          _
        $region20: #{gpt2_mlp.1} parent=11 // pred_fallthru
          _
        // Predicated region
        $region21: #{gpt2_mlp.1} parent=11 // pred_check
          %p185 = pneg %p107
        $region22: #{gpt2_mlp.1} parent=11 // pred_check_branch
          %187 = sbr.rel (%p185) target = $region24
        $region23: #{gpt2_mlp.1} parent=11 // pred_region
          %s189 = ssub.s32 8192, 8192
          %190 = vsyncadd [#allocation6], %s189
          %s191 = sshll.u32 [#allocation7], 4
          %s192 = int_to_ptr.vmem [resolvable:$true] %s191
          %197 = dma.hbm_to_vmem [thread:$0]  %s3, 8192, %s192, [#allocation6], 128, 128, 8
        $region24: #{gpt2_mlp.1} parent=11 // pred_fallthru
          _
        // Predicated region
        $region25: #{gpt2_mlp.1} parent=11 // pred_check
          %p198 = pneg %p128
        $region26: #{gpt2_mlp.1} parent=11 // pred_check_branch
          %200 = sbr.rel (%p198) target = $region28
        $region27: #{gpt2_mlp.1} parent=11 // pred_region
          _
        $region28: #{gpt2_mlp.1} parent=11 // pred_fallthru
          _
      $region12: #{gpt2_mlp.1} parent=5 // pred_fallthru
        _
      %p201 = scmp.lt.s32.totalorder %s18, 2
      // Predicated region
      $region29: #{gpt2_mlp.1} parent=5 // pred_check
        %p202 = pneg %p201
      $region30: #{gpt2_mlp.1} parent=5 // pred_check_branch
        %204 = sbr.rel (%p202) target = $region32
      $region31: #{gpt2_mlp.1} parent=5 // pred_region
        // Predicated region
        $region33: #{gpt2_mlp.1} parent=31 // pred_check
          %p205 = pneg %p38
        $region34: #{gpt2_mlp.1} parent=31 // pred_check_branch
          %207 = sbr.rel (%p205) target = $region36
        $region35: #{gpt2_mlp.1} parent=31 // pred_region
          %s208 = sand.u32 %s28, 1
          %s209 = scalar_lea.sflag [#allocation3], %s208
          %s210 = sand.u32 %s28, 1
          %s211 = smul.addr %s210, 8
          %s212 = scalar_lea.vmem [#allocation2], %s211
          %s214 = ssub.s32 128, 128
          %215 = vsyncadd %s209, %s214
          %s216 = smul.addr %s18, 128
          %s217 = scalar_lea.hbm %s0, %s216
          %s219 = sshll.u32 %s212, 4
          %s220 = int_to_ptr.vmem [resolvable:$true] %s219
          %222 = dma.hbm_to_vmem [thread:$0]  %s217, 128, %s220, %s209
        $region36: #{gpt2_mlp.1} parent=31 // pred_fallthru
          _
      $region32: #{gpt2_mlp.1} parent=5 // pred_fallthru
        _
      %p223 = scmp.le.s32.totalorder 1, %s18
      %p224 = scmp.lt.s32.totalorder %s18, 3
      %p225 = pnand %p223, %p224
      %p226 = pneg %p225
      // Predicated region
      $region37: #{gpt2_mlp.1} parent=5 // pred_check
        _
      $region38: #{gpt2_mlp.1} parent=5 // pred_check_branch
        %228 = sbr.rel (%p225) target = $region40
      $region39: #{gpt2_mlp.1} parent=5 // pred_region
        %s229 = ssub.s32 %s18, 1
        %s230 = sand.u32 %s31, 1
        %s231 = scalar_lea.sflag [#allocation3], %s230
        %s232 = sand.u32 %s31, 1
        %s233 = smul.addr %s232, 8
        %s234 = scalar_lea.vmem [#allocation2], %s233
        // Predicated region
        $region41: #{gpt2_mlp.1} parent=39 // pred_check
          %p235 = pneg %p44
        $region42: #{gpt2_mlp.1} parent=39 // pred_check_branch
          %237 = sbr.rel (%p235) target = $region44
        $region43: #{gpt2_mlp.1} parent=39 // pred_region
          %238 = dma.done %s231, 128
        $region44: #{gpt2_mlp.1} parent=39 // pred_fallthru
          _
        // Predicated region
        $region45: #{gpt2_mlp.1} parent=39 // pred_check
          %p239 = pneg %p65
        $region46: #{gpt2_mlp.1} parent=39 // pred_check_branch
          %241 = sbr.rel (%p239) target = $region48
        $region47: #{gpt2_mlp.1} parent=39 // pred_region
          %242 = dma.done [#allocation6], 8192
        $region48: #{gpt2_mlp.1} parent=39 // pred_fallthru
          _
        // Predicated region
        $region49: #{gpt2_mlp.1} parent=39 // pred_check
          %p243 = pneg %p107
        $region50: #{gpt2_mlp.1} parent=39 // pred_check_branch
          %245 = sbr.rel (%p243) target = $region52
        $region51: #{gpt2_mlp.1} parent=39 // pred_region
          %246 = dma.done [#allocation6], 8192
        $region52: #{gpt2_mlp.1} parent=39 // pred_fallthru
          _
        %s247 = sand.u32 %s31, 1
        %s248 = scalar_lea.sflag [#allocation3], %s247
        %s249 = sand.u32 %s31, 1
        %s250 = smul.addr %s249, 8
        %s251 = scalar_lea.vmem [#allocation2], %s250
        %p252 = pneg %p44
        %p253 = pneg %p41
        %p254 = pneg %p65
        %p255 = pneg %p62
        %p256 = pneg %p86
        %p257 = pneg %p83
        %p258 = pneg %p107
        %p259 = pneg %p104
        %p260 = pneg %p128
        %p261 = pneg %p125
        %p262 = pneg %p154
        %p263 = pneg %p151
        %s264 = sand.u32 %s141, 1
        %s265 = scalar_lea.sflag [#allocation4], %s264
        %s266 = sand.u32 %s141, 1
        %s267 = smul.addr %s266, 8
        %s268 = scalar_lea.vmem [#allocation8], %s267
        %v269 = vld [vmem:[%s234] sm:$0xff]
        %v270 = vld [vmem:[%s4] sm:$0x1]
        %v271 = vld [vmem:[#allocation5] sm:$0xff]
        %v272 = vld [vmem:[#allocation5 + $0x8] sm:$0xff]
        %v273 = vld [vmem:[#allocation5 + $0x10] sm:$0xff]
        %v274 = vld [vmem:[#allocation5 + $0x18] sm:$0xff]
        %v275 = vld [vmem:[#allocation5 + $0x20] sm:$0xff]
        %v276 = vld [vmem:[#allocation5 + $0x28] sm:$0xff]
        %v277 = vld [vmem:[#allocation5 + $0x30] sm:$0xff]
        %v278 = vld [vmem:[#allocation5 + $0x38] sm:$0xff]
        %v279 = vld [vmem:[#allocation5 + $0x40] sm:$0xff]
        %v280 = vld [vmem:[#allocation5 + $0x48] sm:$0xff]
        %v281 = vld [vmem:[#allocation5 + $0x50] sm:$0xff]
        %v282 = vld [vmem:[#allocation5 + $0x58] sm:$0xff]
        %v283 = vld [vmem:[#allocation5 + $0x60] sm:$0xff]
        %v284 = vld [vmem:[#allocation5 + $0x68] sm:$0xff]
        %v285 = vld [vmem:[#allocation5 + $0x70] sm:$0xff]
        %v286 = vld [vmem:[#allocation5 + $0x78] sm:$0xff]
        %v287 = vld [vmem:[#allocation5 + $0x80] sm:$0xff]
        %v288 = vld [vmem:[#allocation5 + $0x88] sm:$0xff]
        %v289 = vld [vmem:[#allocation5 + $0x90] sm:$0xff]
        %v290 = vld [vmem:[#allocation5 + $0x98] sm:$0xff]
        %v291 = vld [vmem:[#allocation5 + $0xa0] sm:$0xff]
        %v292 = vld [vmem:[#allocation5 + $0xa8] sm:$0xff]
        %v293 = vld [vmem:[#allocation5 + $0xb0] sm:$0xff]
        %v294 = vld [vmem:[#allocation5 + $0xb8] sm:$0xff]
        %v295 = vld [vmem:[#allocation5 + $0xc0] sm:$0xff]
        %v296 = vld [vmem:[#allocation5 + $0xc8] sm:$0xff]
        %v297 = vld [vmem:[#allocation5 + $0xd0] sm:$0xff]
        %v298 = vld [vmem:[#allocation5 + $0xd8] sm:$0xff]
        %v299 = vld [vmem:[#allocation5 + $0xe0] sm:$0xff]
        %v300 = vld [vmem:[#allocation5 + $0xe8] sm:$0xff]
        %v301 = vld [vmem:[#allocation5 + $0xf0] sm:$0xff]
        %v302 = vld [vmem:[#allocation5 + $0xf8] sm:$0xff]
        %v303 = vld [vmem:[#allocation5 + $0x100] sm:$0xff]
        %v304 = vld [vmem:[#allocation5 + $0x108] sm:$0xff]
        %v305 = vld [vmem:[#allocation5 + $0x110] sm:$0xff]
        %v306 = vld [vmem:[#allocation5 + $0x118] sm:$0xff]
        %v307 = vld [vmem:[#allocation5 + $0x120] sm:$0xff]
        %v308 = vld [vmem:[#allocation5 + $0x128] sm:$0xff]
        %v309 = vld [vmem:[#allocation5 + $0x130] sm:$0xff]
        %v310 = vld [vmem:[#allocation5 + $0x138] sm:$0xff]
        %v311 = vld [vmem:[#allocation5 + $0x140] sm:$0xff]
        %v312 = vld [vmem:[#allocation5 + $0x148] sm:$0xff]
        %v313 = vld [vmem:[#allocation5 + $0x150] sm:$0xff]
        %v314 = vld [vmem:[#allocation5 + $0x158] sm:$0xff]
        %v315 = vld [vmem:[#allocation5 + $0x160] sm:$0xff]
        %v316 = vld [vmem:[#allocation5 + $0x168] sm:$0xff]
        %v317 = vld [vmem:[#allocation5 + $0x170] sm:$0xff]
        %v318 = vld [vmem:[#allocation5 + $0x178] sm:$0xff]
        %v319 = vld [vmem:[#allocation5 + $0x180] sm:$0xff]
        %v320 = vld [vmem:[#allocation5 + $0x188] sm:$0xff]
        %v321 = vld [vmem:[#allocation5 + $0x190] sm:$0xff]
        %v322 = vld [vmem:[#allocation5 + $0x198] sm:$0xff]
        %v323 = vld [vmem:[#allocation5 + $0x1a0] sm:$0xff]
        %v324 = vld [vmem:[#allocation5 + $0x1a8] sm:$0xff]
        %v325 = vld [vmem:[#allocation5 + $0x1b0] sm:$0xff]
        %v326 = vld [vmem:[#allocation5 + $0x1b8] sm:$0xff]
        %v327 = vld [vmem:[#allocation5 + $0x1c0] sm:$0xff]
        %v328 = vld [vmem:[#allocation5 + $0x1c8] sm:$0xff]
        %v329 = vld [vmem:[#allocation5 + $0x1d0] sm:$0xff]
        %v330 = vld [vmem:[#allocation5 + $0x1d8] sm:$0xff]
        %v331 = vld [vmem:[#allocation5 + $0x1e0] sm:$0xff]
        %v332 = vld [vmem:[#allocation5 + $0x1e8] sm:$0xff]
        %v333 = vld [vmem:[#allocation5 + $0x1f0] sm:$0xff]
        %v334 = vld [vmem:[#allocation5 + $0x1f8] sm:$0xff]
        %v335 = vld [vmem:[%s2] sm:$0xf]
        %v337 = vlaneseq
        %v338 = vshrl.u32 %v337, 7
        %v339 = vsub.s32 0, %v338
        %v340 = vrot.slane %v335, %v339
        %v341 = vlaneseq
        %v342 = vshrl.u32 %v341, 7
        %v343 = vsub.s32 1, %v342
        %v344 = vrot.slane %v335, %v343
        %v345 = vlaneseq
        %v346 = vshrl.u32 %v345, 7
        %v347 = vsub.s32 2, %v346
        %v348 = vrot.slane %v335, %v347
        %v349 = vlaneseq
        %v350 = vshrl.u32 %v349, 7
        %v351 = vsub.s32 3, %v350
        %v352 = vrot.slane %v335, %v351
        %357 = vmatprep.subr.mxu0 %v272
        %358 = vmatpush1.msra.mxu0 %v271
        %359 = vmatprep.subr.mxu0 %v276
        %360 = vmatpush1.msra.mxu0 %v275
        %361 = vmatprep.subr.mxu0 %v280
        %362 = vmatpush1.msra.mxu0 %v279
        %363 = vmatprep.subr.mxu0 %v284
        %364 = vmatpush1.msra.mxu0 %v283
        %365 = vmatprep.subr.mxu0 %v288
        %366 = vmatpush1.msra.mxu0 %v287
        %367 = vmatprep.subr.mxu0 %v292
        %368 = vmatpush1.msra.mxu0 %v291
        %369 = vmatprep.subr.mxu0 %v296
        %370 = vmatpush1.msra.mxu0 %v295
        %371 = vmatprep.subr.mxu0 %v300
        %372 = vmatpush1.msra.mxu0 %v299
        %373 = vmatprep.subr.mxu0 %v304
        %374 = vmatpush1.msra.mxu0 %v303
        %375 = vmatprep.subr.mxu0 %v308
        %376 = vmatpush1.msra.mxu0 %v307
        %377 = vmatprep.subr.mxu0 %v312
        %378 = vmatpush1.msra.mxu0 %v311
        %379 = vmatprep.subr.mxu0 %v316
        %380 = vmatpush1.msra.mxu0 %v315
        %381 = vmatprep.subr.mxu0 %v320
        %382 = vmatpush1.msra.mxu0 %v319
        %383 = vmatprep.subr.mxu0 %v324
        %384 = vmatpush1.msra.mxu0 %v323
        %385 = vmatprep.subr.mxu0 %v328
        %386 = vmatpush1.msra.mxu0 %v327
        %387 = vmatprep.subr.mxu0 %v332
        %388 = vmatpush1.msra.mxu0 %v331
        %389 = vmatprep.subr.mxu0 0.0
        %390 = vmatpush1.msra.mxu0 0.0
        %391 = vmatprep.subr.mxu0 0.0
        %392 = vmatpush1.msra.mxu0 0.0
        %393 = vmatprep.subr.mxu0 0.0
        %394 = vmatpush1.msra.mxu0 0.0
        %395 = vmatprep.subr.mxu0 0.0
        %396 = vmatpush1.msra.mxu0 0.0
        %397 = vmatprep.subr.mxu0 0.0
        %398 = vmatpush1.msra.mxu0 0.0
        %399 = vmatprep.subr.mxu0 0.0
        %400 = vmatpush1.msra.mxu0 0.0
        %401 = vmatprep.subr.mxu0 0.0
        %402 = vmatpush1.msra.mxu0 0.0
        %403 = vmatprep.subr.mxu0 0.0
        %404 = vmatpush1.msra.mxu0 0.0
        %405 = vmatprep.subr.mxu0 0.0
        %406 = vmatpush1.msra.mxu0 0.0
        %407 = vmatprep.subr.mxu0 0.0
        %408 = vmatpush1.msra.mxu0 0.0
        %409 = vmatprep.subr.mxu0 0.0
        %410 = vmatpush1.msra.mxu0 0.0
        %411 = vmatprep.subr.mxu0 0.0
        %412 = vmatpush1.msra.mxu0 0.0
        %413 = vmatprep.subr.mxu0 0.0
        %414 = vmatpush1.msra.mxu0 0.0
        %415 = vmatprep.subr.mxu0 0.0
        %416 = vmatpush1.msra.mxu0 0.0
        %417 = vmatprep.subr.mxu0 0.0
        %418 = vmatpush1.msra.mxu0 0.0
        %419 = vmatprep.subr.mxu0 0.0
        %420 = vmatpush1.msra.mxu0 0.0
        %421 = vmatprep.mubr.f32.mxu0 0.0
        %422 = vmatmul.mubr.f32.gmra.mrb[0].mxu0 %v269
        %v423 = vpop.f32.mrb[0].mxu0
        %v424 = vadd.f32 %v340, %v423
        %v425 = vpop.f32.mrb[0].mxu0
        %v426 = vadd.f32 %v344, %v425
        %427 = vdwg.mxu0
        %428 = vmatprep.subr.mxu0 %v274
        %429 = vmatpush1.msra.mxu0 %v273
        %430 = vmatprep.subr.mxu0 %v278
        %431 = vmatpush1.msra.mxu0 %v277
        %432 = vmatprep.subr.mxu0 %v282
        %433 = vmatpush1.msra.mxu0 %v281
        %434 = vmatprep.subr.mxu0 %v286
        %435 = vmatpush1.msra.mxu0 %v285
        %436 = vmatprep.subr.mxu0 %v290
        %437 = vmatpush1.msra.mxu0 %v289
        %438 = vmatprep.subr.mxu0 %v294
        %439 = vmatpush1.msra.mxu0 %v293
        %440 = vmatprep.subr.mxu0 %v298
        %441 = vmatpush1.msra.mxu0 %v297
        %442 = vmatprep.subr.mxu0 %v302
        %443 = vmatpush1.msra.mxu0 %v301
        %444 = vmatprep.subr.mxu0 %v306
        %445 = vmatpush1.msra.mxu0 %v305
        %446 = vmatprep.subr.mxu0 %v310
        %447 = vmatpush1.msra.mxu0 %v309
        %448 = vmatprep.subr.mxu0 %v314
        %449 = vmatpush1.msra.mxu0 %v313
        %450 = vmatprep.subr.mxu0 %v318
        %451 = vmatpush1.msra.mxu0 %v317
        %452 = vmatprep.subr.mxu0 %v322
        %453 = vmatpush1.msra.mxu0 %v321
        %454 = vmatprep.subr.mxu0 %v326
        %455 = vmatpush1.msra.mxu0 %v325
        %456 = vmatprep.subr.mxu0 %v330
        %457 = vmatpush1.msra.mxu0 %v329
        %458 = vmatprep.subr.mxu0 %v334
        %459 = vmatpush1.msra.mxu0 %v333
        %460 = vmatprep.subr.mxu0 0.0
        %461 = vmatpush1.msra.mxu0 0.0
        %462 = vmatprep.subr.mxu0 0.0
        %463 = vmatpush1.msra.mxu0 0.0
        %464 = vmatprep.subr.mxu0 0.0
        %465 = vmatpush1.msra.mxu0 0.0
        %466 = vmatprep.subr.mxu0 0.0
        %467 = vmatpush1.msra.mxu0 0.0
        %468 = vmatprep.subr.mxu0 0.0
        %469 = vmatpush1.msra.mxu0 0.0
        %470 = vmatprep.subr.mxu0 0.0
        %471 = vmatpush1.msra.mxu0 0.0
        %472 = vmatprep.subr.mxu0 0.0
        %473 = vmatpush1.msra.mxu0 0.0
        %474 = vmatprep.subr.mxu0 0.0
        %475 = vmatpush1.msra.mxu0 0.0
        %476 = vmatprep.subr.mxu0 0.0
        %477 = vmatpush1.msra.mxu0 0.0
        %478 = vmatprep.subr.mxu0 0.0
        %479 = vmatpush1.msra.mxu0 0.0
        %480 = vmatprep.subr.mxu0 0.0
        %481 = vmatpush1.msra.mxu0 0.0
        %482 = vmatprep.subr.mxu0 0.0
        %483 = vmatpush1.msra.mxu0 0.0
        %484 = vmatprep.subr.mxu0 0.0
        %485 = vmatpush1.msra.mxu0 0.0
        %486 = vmatprep.subr.mxu0 0.0
        %487 = vmatpush1.msra.mxu0 0.0
        %488 = vmatprep.subr.mxu0 0.0
        %489 = vmatpush1.msra.mxu0 0.0
        %490 = vmatprep.subr.mxu0 0.0
        %491 = vmatpush1.msra.mxu0 0.0
        %492 = vmatprep.mubr.f32.mxu0 0.0
        %493 = vmatmul.mubr.f32.gmra.mrb[0].mxu0 %v269
        %v494 = vpop.f32.mrb[0].mxu0
        %v495 = vadd.f32 %v348, %v494
        %v496 = vpop.f32.mrb[0].mxu0
        %v497 = vadd.f32 %v352, %v496
        %498 = vdwg.mxu0
        %v499 = vmul.f32 %v424, 0.5
        %v500 = vmul.f32 %v426, 0.5
        %v501 = vmul.f32 %v495, 0.5
        %v502 = vmul.f32 %v497, 0.5
        %v503 = vmul.f32 %v424, 0.7978846
        %v504 = vmul.f32 %v426, 0.7978846
        %v505 = vmul.f32 %v495, 0.7978846
        %v506 = vmul.f32 %v497, 0.7978846
        %v507 = vmul.f32 %v424, 0.044715
        %v508 = vmul.f32 %v426, 0.044715
        %v509 = vmul.f32 %v495, 0.044715
        %v510 = vmul.f32 %v497, 0.044715
        %v511 = vmul.f32 %v507, %v424
        %v512 = vmul.f32 %v508, %v426
        %v513 = vmul.f32 %v509, %v495
        %v514 = vmul.f32 %v510, %v497
        %v515 = vadd.f32 %v511, 1.0
        %v516 = vadd.f32 %v512, 1.0
        %v517 = vadd.f32 %v513, 1.0
        %v518 = vadd.f32 %v514, 1.0
        %v519 = vmul.f32 %v503, %v515
        %v520 = vmul.f32 %v504, %v516
        %v521 = vmul.f32 %v505, %v517
        %v522 = vmul.f32 %v506, %v518
        %v523 = vtanh.pop %v519
        %v524 = vtanh.pop %v520
        %v525 = vtanh.pop %v521
        %v526 = vtanh.pop %v522
        %v527 = vadd.f32 %v523, 1.0
        %v528 = vadd.f32 %v524, 1.0
        %v529 = vadd.f32 %v525, 1.0
        %v530 = vadd.f32 %v526, 1.0
        %v531 = vmul.f32 %v499, %v527
        %v532 = vmul.f32 %v500, %v528
        %v533 = vmul.f32 %v501, %v529
        %v534 = vmul.f32 %v502, %v530
        %v535 = vld [vmem:[#allocation7] sm:$0xff]
        %v536 = vld [vmem:[#allocation7 + $0x8] sm:$0xff]
        %v537 = vld [vmem:[#allocation7 + $0x10] sm:$0xff]
        %v538 = vld [vmem:[#allocation7 + $0x18] sm:$0xff]
        %v539 = vld [vmem:[#allocation7 + $0x20] sm:$0xff]
        %v540 = vld [vmem:[#allocation7 + $0x28] sm:$0xff]
        %v541 = vld [vmem:[#allocation7 + $0x30] sm:$0xff]
        %v542 = vld [vmem:[#allocation7 + $0x38] sm:$0xff]
        %v543 = vld [vmem:[#allocation7 + $0x40] sm:$0xff]
        %v544 = vld [vmem:[#allocation7 + $0x48] sm:$0xff]
        %v545 = vld [vmem:[#allocation7 + $0x50] sm:$0xff]
        %v546 = vld [vmem:[#allocation7 + $0x58] sm:$0xff]
        %v547 = vld [vmem:[#allocation7 + $0x60] sm:$0xff]
        %v548 = vld [vmem:[#allocation7 + $0x68] sm:$0xff]
        %v549 = vld [vmem:[#allocation7 + $0x70] sm:$0xff]
        %v550 = vld [vmem:[#allocation7 + $0x78] sm:$0xff]
        %v551 = vld [vmem:[#allocation7 + $0x80] sm:$0xff]
        %v552 = vld [vmem:[#allocation7 + $0x88] sm:$0xff]
        %v553 = vld [vmem:[#allocation7 + $0x90] sm:$0xff]
        %v554 = vld [vmem:[#allocation7 + $0x98] sm:$0xff]
        %v555 = vld [vmem:[#allocation7 + $0xa0] sm:$0xff]
        %v556 = vld [vmem:[#allocation7 + $0xa8] sm:$0xff]
        %v557 = vld [vmem:[#allocation7 + $0xb0] sm:$0xff]
        %v558 = vld [vmem:[#allocation7 + $0xb8] sm:$0xff]
        %v559 = vld [vmem:[#allocation7 + $0xc0] sm:$0xff]
        %v560 = vld [vmem:[#allocation7 + $0xc8] sm:$0xff]
        %v561 = vld [vmem:[#allocation7 + $0xd0] sm:$0xff]
        %v562 = vld [vmem:[#allocation7 + $0xd8] sm:$0xff]
        %v563 = vld [vmem:[#allocation7 + $0xe0] sm:$0xff]
        %v564 = vld [vmem:[#allocation7 + $0xe8] sm:$0xff]
        %v565 = vld [vmem:[#allocation7 + $0xf0] sm:$0xff]
        %v566 = vld [vmem:[#allocation7 + $0xf8] sm:$0xff]
        %v567 = vld [vmem:[#allocation7 + $0x100] sm:$0xff]
        %v568 = vld [vmem:[#allocation7 + $0x108] sm:$0xff]
        %v569 = vld [vmem:[#allocation7 + $0x110] sm:$0xff]
        %v570 = vld [vmem:[#allocation7 + $0x118] sm:$0xff]
        %v571 = vld [vmem:[#allocation7 + $0x120] sm:$0xff]
        %v572 = vld [vmem:[#allocation7 + $0x128] sm:$0xff]
        %v573 = vld [vmem:[#allocation7 + $0x130] sm:$0xff]
        %v574 = vld [vmem:[#allocation7 + $0x138] sm:$0xff]
        %v575 = vld [vmem:[#allocation7 + $0x140] sm:$0xff]
        %v576 = vld [vmem:[#allocation7 + $0x148] sm:$0xff]
        %v577 = vld [vmem:[#allocation7 + $0x150] sm:$0xff]
        %v578 = vld [vmem:[#allocation7 + $0x158] sm:$0xff]
        %v579 = vld [vmem:[#allocation7 + $0x160] sm:$0xff]
        %v580 = vld [vmem:[#allocation7 + $0x168] sm:$0xff]
        %v581 = vld [vmem:[#allocation7 + $0x170] sm:$0xff]
        %v582 = vld [vmem:[#allocation7 + $0x178] sm:$0xff]
        %v583 = vld [vmem:[#allocation7 + $0x180] sm:$0xff]
        %v584 = vld [vmem:[#allocation7 + $0x188] sm:$0xff]
        %v585 = vld [vmem:[#allocation7 + $0x190] sm:$0xff]
        %v586 = vld [vmem:[#allocation7 + $0x198] sm:$0xff]
        %v587 = vld [vmem:[#allocation7 + $0x1a0] sm:$0xff]
        %v588 = vld [vmem:[#allocation7 + $0x1a8] sm:$0xff]
        %v589 = vld [vmem:[#allocation7 + $0x1b0] sm:$0xff]
        %v590 = vld [vmem:[#allocation7 + $0x1b8] sm:$0xff]
        %v591 = vld [vmem:[#allocation7 + $0x1c0] sm:$0xff]
        %v592 = vld [vmem:[#allocation7 + $0x1c8] sm:$0xff]
        %v593 = vld [vmem:[#allocation7 + $0x1d0] sm:$0xff]
        %v594 = vld [vmem:[#allocation7 + $0x1d8] sm:$0xff]
        %v595 = vld [vmem:[#allocation7 + $0x1e0] sm:$0xff]
        %v596 = vld [vmem:[#allocation7 + $0x1e8] sm:$0xff]
        %v597 = vld [vmem:[#allocation7 + $0x1f0] sm:$0xff]
        %v598 = vld [vmem:[#allocation7 + $0x1f8] sm:$0xff]
        %v600 = vlaneseq
        %v601 = vshrl.u32 %v600, 7
        %v602 = vsub.s32 0, %v601
        %v603 = vrot.slane %v270, %v602
        %605 = vmatprep.subr.mxu0 0.0
        %606 = vmatpush1.msra.mxu0 %v535
        %607 = vmatprep.subr.mxu0 0.0
        %608 = vmatpush1.msra.mxu0 %v536
        %609 = vmatprep.subr.mxu0 0.0
        %610 = vmatpush1.msra.mxu0 %v537
        %611 = vmatprep.subr.mxu0 0.0
        %612 = vmatpush1.msra.mxu0 %v538
        %613 = vmatprep.subr.mxu0 0.0
        %614 = vmatpush1.msra.mxu0 %v539
        %615 = vmatprep.subr.mxu0 0.0
        %616 = vmatpush1.msra.mxu0 %v540
        %617 = vmatprep.subr.mxu0 0.0
        %618 = vmatpush1.msra.mxu0 %v541
        %619 = vmatprep.subr.mxu0 0.0
        %620 = vmatpush1.msra.mxu0 %v542
        %621 = vmatprep.subr.mxu0 0.0
        %622 = vmatpush1.msra.mxu0 %v543
        %623 = vmatprep.subr.mxu0 0.0
        %624 = vmatpush1.msra.mxu0 %v544
        %625 = vmatprep.subr.mxu0 0.0
        %626 = vmatpush1.msra.mxu0 %v545
        %627 = vmatprep.subr.mxu0 0.0
        %628 = vmatpush1.msra.mxu0 %v546
        %629 = vmatprep.subr.mxu0 0.0
        %630 = vmatpush1.msra.mxu0 %v547
        %631 = vmatprep.subr.mxu0 0.0
        %632 = vmatpush1.msra.mxu0 %v548
        %633 = vmatprep.subr.mxu0 0.0
        %634 = vmatpush1.msra.mxu0 %v549
        %635 = vmatprep.subr.mxu0 0.0
        %636 = vmatpush1.msra.mxu0 %v550
        %637 = vmatprep.subr.mxu0 0.0
        %638 = vmatpush1.msra.mxu0 %v551
        %639 = vmatprep.subr.mxu0 0.0
        %640 = vmatpush1.msra.mxu0 %v552
        %641 = vmatprep.subr.mxu0 0.0
        %642 = vmatpush1.msra.mxu0 %v553
        %643 = vmatprep.subr.mxu0 0.0
        %644 = vmatpush1.msra.mxu0 %v554
        %645 = vmatprep.subr.mxu0 0.0
        %646 = vmatpush1.msra.mxu0 %v555
        %647 = vmatprep.subr.mxu0 0.0
        %648 = vmatpush1.msra.mxu0 %v556
        %649 = vmatprep.subr.mxu0 0.0
        %650 = vmatpush1.msra.mxu0 %v557
        %651 = vmatprep.subr.mxu0 0.0
        %652 = vmatpush1.msra.mxu0 %v558
        %653 = vmatprep.subr.mxu0 0.0
        %654 = vmatpush1.msra.mxu0 %v559
        %655 = vmatprep.subr.mxu0 0.0
        %656 = vmatpush1.msra.mxu0 %v560
        %657 = vmatprep.subr.mxu0 0.0
        %658 = vmatpush1.msra.mxu0 %v561
        %659 = vmatprep.subr.mxu0 0.0
        %660 = vmatpush1.msra.mxu0 %v562
        %661 = vmatprep.subr.mxu0 0.0
        %662 = vmatpush1.msra.mxu0 %v563
        %663 = vmatprep.subr.mxu0 0.0
        %664 = vmatpush1.msra.mxu0 %v564
        %665 = vmatprep.subr.mxu0 0.0
        %666 = vmatpush1.msra.mxu0 %v565
        %667 = vmatprep.subr.mxu0 0.0
        %668 = vmatpush1.msra.mxu0 %v566
        %669 = vmatprep.mubr.f32.mxu0 %v532
        %670 = vmatmul.mubr.f32.gmra.mrb[0].mxu0 %v531
        %v671 = vpop.f32.mrb[0].mxu0
        %v672 = vadd.f32 %v603, %v671
        %v673 = vpop.f32.mrb[0].mxu0
        %674 = vdwg.mxu0
        %675 = vmatprep.subr.mxu0 0.0
        %676 = vmatpush1.msra.mxu0 %v567
        %677 = vmatprep.subr.mxu0 0.0
        %678 = vmatpush1.msra.mxu0 %v568
        %679 = vmatprep.subr.mxu0 0.0
        %680 = vmatpush1.msra.mxu0 %v569
        %681 = vmatprep.subr.mxu0 0.0
        %682 = vmatpush1.msra.mxu0 %v570
        %683 = vmatprep.subr.mxu0 0.0
        %684 = vmatpush1.msra.mxu0 %v571
        %685 = vmatprep.subr.mxu0 0.0
        %686 = vmatpush1.msra.mxu0 %v572
        %687 = vmatprep.subr.mxu0 0.0
        %688 = vmatpush1.msra.mxu0 %v573
        %689 = vmatprep.subr.mxu0 0.0
        %690 = vmatpush1.msra.mxu0 %v574
        %691 = vmatprep.subr.mxu0 0.0
        %692 = vmatpush1.msra.mxu0 %v575
        %693 = vmatprep.subr.mxu0 0.0
        %694 = vmatpush1.msra.mxu0 %v576
        %695 = vmatprep.subr.mxu0 0.0
        %696 = vmatpush1.msra.mxu0 %v577
        %697 = vmatprep.subr.mxu0 0.0
        %698 = vmatpush1.msra.mxu0 %v578
        %699 = vmatprep.subr.mxu0 0.0
        %700 = vmatpush1.msra.mxu0 %v579
        %701 = vmatprep.subr.mxu0 0.0
        %702 = vmatpush1.msra.mxu0 %v580
        %703 = vmatprep.subr.mxu0 0.0
        %704 = vmatpush1.msra.mxu0 %v581
        %705 = vmatprep.subr.mxu0 0.0
        %706 = vmatpush1.msra.mxu0 %v582
        %707 = vmatprep.subr.mxu0 0.0
        %708 = vmatpush1.msra.mxu0 %v583
        %709 = vmatprep.subr.mxu0 0.0
        %710 = vmatpush1.msra.mxu0 %v584
        %711 = vmatprep.subr.mxu0 0.0
        %712 = vmatpush1.msra.mxu0 %v585
        %713 = vmatprep.subr.mxu0 0.0
        %714 = vmatpush1.msra.mxu0 %v586
        %715 = vmatprep.subr.mxu0 0.0
        %716 = vmatpush1.msra.mxu0 %v587
        %717 = vmatprep.subr.mxu0 0.0
        %718 = vmatpush1.msra.mxu0 %v588
        %719 = vmatprep.subr.mxu0 0.0
        %720 = vmatpush1.msra.mxu0 %v589
        %721 = vmatprep.subr.mxu0 0.0
        %722 = vmatpush1.msra.mxu0 %v590
        %723 = vmatprep.subr.mxu0 0.0
        %724 = vmatpush1.msra.mxu0 %v591
        %725 = vmatprep.subr.mxu0 0.0
        %726 = vmatpush1.msra.mxu0 %v592
        %727 = vmatprep.subr.mxu0 0.0
        %728 = vmatpush1.msra.mxu0 %v593
        %729 = vmatprep.subr.mxu0 0.0
        %730 = vmatpush1.msra.mxu0 %v594
        %731 = vmatprep.subr.mxu0 0.0
        %732 = vmatpush1.msra.mxu0 %v595
        %733 = vmatprep.subr.mxu0 0.0
        %734 = vmatpush1.msra.mxu0 %v596
        %735 = vmatprep.subr.mxu0 0.0
        %736 = vmatpush1.msra.mxu0 %v597
        %737 = vmatprep.subr.mxu0 0.0
        %738 = vmatpush1.msra.mxu0 %v598
        %739 = vmatprep.mubr.f32.mxu0 %v534
        %740 = vmatmul.mubr.f32.gmra.mrb[0].mxu0 %v533
        %v741 = vpop.f32.mrb[0].mxu0
        %v742 = vadd.f32 %v672, %v741
        %v743 = vpop.f32.mrb[0].mxu0
        %744 = vdwg.mxu0
        %745 = vst [vmem:[%s268] sm:$0xff] %v742
        %s746 = sand.u32 %s141, 1
        %s747 = scalar_lea.sflag [#allocation4], %s746
        %s748 = sand.u32 %s141, 1
        %s749 = smul.addr %s748, 8
        %s750 = scalar_lea.vmem [#allocation8], %s749
        // Predicated region
        $region53: #{gpt2_mlp.1} parent=39 // pred_check
          %p751 = pneg %p151
        $region54: #{gpt2_mlp.1} parent=39 // pred_check_branch
          %753 = sbr.rel (%p751) target = $region56
        $region55: #{gpt2_mlp.1} parent=39 // pred_region
          %s755 = ssub.s32 128, 128
          %756 = vsyncadd %s747, %s755
          %s757 = smul.addr %s23, 128
          %s758 = scalar_lea.hbm %s5, %s757
          %s760 = sshll.u32 %s750, 4
          %s761 = int_to_ptr.vmem [resolvable:$true] %s760
          %763 = dma.vmem_to_hbm [thread:$0]  %s761, 128, %s758, %s747
        $region56: #{gpt2_mlp.1} parent=39 // pred_fallthru
          _
      $region40: #{gpt2_mlp.1} parent=5 // pred_fallthru
        _
      %p764 = scmp.le.s32.totalorder 2, %s18
      // Predicated region
      $region57: #{gpt2_mlp.1} parent=5 // pred_check
        %p765 = pneg %p764
      $region58: #{gpt2_mlp.1} parent=5 // pred_check_branch
        %767 = sbr.rel (%p765) target = $region60
      $region59: #{gpt2_mlp.1} parent=5 // pred_region
        %s768 = ssub.s32 %s18, 2
        // Predicated region
        $region61: #{gpt2_mlp.1} parent=59 // pred_check
          %p769 = pneg %p157
        $region62: #{gpt2_mlp.1} parent=59 // pred_check_branch
          %771 = sbr.rel (%p769) target = $region64
        $region63: #{gpt2_mlp.1} parent=59 // pred_region
          %s772 = sand.u32 %s142, 1
          %s773 = scalar_lea.sflag [#allocation4], %s772
          %s774 = sand.u32 %s142, 1
          %s775 = smul.addr %s774, 8
          %s776 = scalar_lea.vmem [#allocation8], %s775
          %777 = dma.done %s773, 128
        $region64: #{gpt2_mlp.1} parent=59 // pred_fallthru
          _
      $region60: #{gpt2_mlp.1} parent=5 // pred_fallthru
        _
    $region6: #{gpt2_mlp.1} parent=1 // loop_footer
      %s22 = sadd.s32 1, %s18
    $region7: #{gpt2_mlp.1} parent=1 // loop_footer_branch
      %17 = sbr.rel target = $region3
    $region8: #{gpt2_mlp.1} parent=1 // loop_exit
      _
    %778 = vsyncpa [#allocation3], 1
    %s779 = scalar_lea.sflag [#allocation3], 1
    %780 = vsyncpa %s779, 1
    %781 = vsyncpa [#allocation6], 1
    %782 = vsyncpa [#allocation4], 1
    %s783 = scalar_lea.sflag [#allocation4], 1
    %784 = vsyncpa %s783, 1

</llo_original>
